<compile_context>
chip_gen: v5e
topology: v5e:2x2
jax: 0.10.0
libtpu: 0.0.40
codegen_flags: <defaults>
</compile_context>

<pallas_src>
import functools
import math

import jax
import jax.numpy as jnp
from jax import lax
from jax.experimental import pallas as pl
from jax.experimental.pallas import tpu as pltpu

NEG_SLOPE = 0.01
BN_EPS = 1e-5

_VMEM_LIMIT = 48 * 1024 * 1024        # raised scoped-VMEM limit (all gens)
_VMEM_BUDGET_WRITE = 36 * 2 ** 20     # target working set, write pass
_VMEM_BUDGET_STATS = 8 * 2 ** 20      # target input-buffer budget, stats pass


def _round_up(x, m):
    return ((x + m - 1) // m) * m


# ----------------------------------------------------------------------------
# Kernel A: per-column sum + Gram matrix (X^T X) of the input pixels.
# BN batch statistics of the deconv output are derived from these in the
# wrapper (no deconv output is ever materialized for pass 1).
# ----------------------------------------------------------------------------
def _stats_kernel(x_ref, sum_ref, gram_ref):
    @pl.when(pl.program_id(1) == 0)
    def _():
        sum_ref[...] = jnp.zeros_like(sum_ref)
        gram_ref[...] = jnp.zeros_like(gram_ref)

    x = x_ref[...]
    sum_ref[...] += jnp.sum(x, axis=0, keepdims=True)[None]
    gram_ref[...] += lax.dot_general(
        x, x, dimension_numbers=(((0,), (0,)), ((), ())),
        preferred_element_type=jnp.float32)[None]


def input_stats(x_pad, *, rows_per_step, ncore):
    rows, cin = x_pad.shape
    steps = (rows // rows_per_step) // ncore
    flops = 2 * rows * cin * cin + rows * cin
    bytes_acc = rows * cin * 4 + ncore * (cin * cin + cin) * 4
    return pl.pallas_call(
        _stats_kernel,
        out_shape=(jax.ShapeDtypeStruct((ncore, 1, cin), jnp.float32),
                   jax.ShapeDtypeStruct((ncore, cin, cin), jnp.float32)),
        grid=(ncore, steps),
        in_specs=[pl.BlockSpec((rows_per_step, cin),
                               lambda c, i: (c * steps + i, 0))],
        out_specs=(pl.BlockSpec((1, 1, cin), lambda c, i: (c, 0, 0)),
                   pl.BlockSpec((1, cin, cin), lambda c, i: (c, 0, 0))),
        compiler_params=pltpu.CompilerParams(
            dimension_semantics=("parallel", "arbitrary"),
            vmem_limit_bytes=_VMEM_LIMIT),
        cost_estimate=pl.CostEstimate(flops=int(flops), transcendentals=0,
                                      bytes_accessed=int(bytes_acc)),
    )(x_pad)


# ----------------------------------------------------------------------------
# Kernel B: fused deconv-matmul + BN normalize/affine + LeakyReLU.
# Output rows are P packed pixels wide (NW = P*4*Cout, a multiple of 128 when
# P is uncapped) -> lane-dense stores.
# ----------------------------------------------------------------------------
def _deconv_bn_act_kernel(xg_ref, w_ref, scale_ref, shift_ref, o_ref, *,
                          neg_slope):
    y = jnp.dot(xg_ref[...], w_ref[...], preferred_element_type=jnp.float32)
    z = y * scale_ref[...] + shift_ref[...]
    o_ref[...] = jnp.where(z >= 0, z, neg_slope * z).astype(o_ref.dtype)


def deconv_bn_act(xg, w_bd, scale_row, shift_row, *, tm):
    mp, k = xg.shape
    _, nw = w_bd.shape
    flops = 2 * mp * k * nw + 3 * mp * nw
    bytes_acc = (mp * k + k * nw + 2 * nw + mp * nw) * 4
    return pl.pallas_call(
        functools.partial(_deconv_bn_act_kernel, neg_slope=NEG_SLOPE),
        out_shape=jax.ShapeDtypeStruct((mp, nw), jnp.float32),
        grid=(mp // tm,),
        in_specs=[
            pl.BlockSpec((tm, k), lambda i: (i, 0)),
            pl.BlockSpec((k, nw), lambda i: (0, 0)),
            pl.BlockSpec((1, nw), lambda i: (0, 0)),
            pl.BlockSpec((1, nw), lambda i: (0, 0)),
        ],
        out_specs=pl.BlockSpec((tm, nw), lambda i: (i, 0)),
        compiler_params=pltpu.CompilerParams(
            dimension_semantics=("parallel",),
            vmem_limit_bytes=_VMEM_LIMIT),
        cost_estimate=pl.CostEstimate(flops=int(flops), transcendentals=0,
                                      bytes_accessed=int(bytes_acc)),
    )(xg, w_bd, scale_row, shift_row)


# ----------------------------------------------------------------------------
# Full forward: ConvTranspose2d(k=2, s=2) -> BatchNorm2d(batch stats) -> LeakyReLU
# ----------------------------------------------------------------------------
def deconvolution_layer_forward(x_nchw, weight, bias, gamma, beta):
    """x_nchw: (N, Cin, H, W).  weight: (Cin, Cout, 2, 2) (PyTorch layout)."""
    del bias  # per-channel constant before train-mode BatchNorm cancels exactly.

    N, Cin, H, W = x_nchw.shape
    Cout = weight.shape[1]
    kHW = 4                                        # 2x2 taps

    # --- packing factor: P pixels/row so NW = P*4*Cout is a multiple of 128,
    #     capped so the block-diagonal weight (VMEM + zero-FLOP MXU work)
    #     stays small for odd Cout / large Cin. ---
    P = 128 // math.gcd(kHW * Cout, 128)
    while P > 1 and (P * Cin) * (P * kHW * Cout) * 4 > (2 << 20):
        P //= 2
    K = P * Cin
    NW = P * kHW * Cout

    M = N * H * W                                  # input pixels
    Mp = pl.cdiv(M, P)                             # packed rows needed

    # --- write-pass row tile: as large as VMEM allows (<= 4096), then bound
    #     padding waste to <= ~12.5% (or a single rounded tile). ---
    def _write_vmem(t):
        return 4 * (2 * t * (K + NW) + 2 * K * NW + 4 * NW)

    tm = 4096
    while tm > 256 and _write_vmem(tm) > _VMEM_BUDGET_WRITE:
        tm //= 2
    tm = min(tm, _round_up(Mp, 8))
    while tm > 256 and _round_up(Mp, tm) - Mp > Mp // 8:
        tm = _round_up(tm // 2, 8)
    Mp_pad = _round_up(Mp, tm)

    # --- stats-pass tile (rows of un-packed pixels), VMEM-budgeted while
    #     keeping grid divisibility and the (8, lane) constraint. ---
    tms_blocks = tm
    lane_f = max(Cin, 128)                         # lane padding of a (rows,Cin) tile
    while (2 * tms_blocks * P * lane_f * 4 > _VMEM_BUDGET_STATS
           and tms_blocks % 2 == 0
           and ((tms_blocks // 2) * P) % 8 == 0
           and Mp_pad % (tms_blocks // 2) == 0):
        tms_blocks //= 2
    rows_per_step = tms_blocks * P
    total_blocks = Mp_pad // tms_blocks
    ncore = 2 if (total_blocks % 2 == 0 and total_blocks >= 2) else 1

    # --- glue: NCHW -> channels-last pixel rows, zero-padded once.  The
    #     stats pass reads the (rows, Cin) view, the write pass reads the
    #     packed (Mp_pad, K) view of the SAME buffer (free reshape). ---
    # TODO(synk): fold this input transpose into the kernels (native NCHW read).
    x_rows = jnp.transpose(x_nchw, (0, 2, 3, 1)).reshape(M, Cin)
    x_rows = x_rows.astype(jnp.float32)
    pad_rows = Mp_pad * P - M
    if pad_rows:
        x_rows = jnp.pad(x_rows, ((0, pad_rows), (0, 0)))
    xg = x_rows.reshape(Mp_pad, K)

    # Weight: (Cin, Cout, 2, 2) -> (Cin, 4*Cout), columns ordered (ki, kj, co),
    # then block-diagonal replication for the P-pixel packing.
    w_mat = jnp.transpose(weight, (0, 2, 3, 1)).reshape(Cin, kHW * Cout)
    w_mat = w_mat.astype(jnp.float32)
    if P > 1:
        eye = jnp.eye(P, dtype=jnp.float32)
        w_bd = jnp.einsum("gp,kc->gkpc", eye, w_mat).reshape(K, NW)
    else:
        w_bd = w_mat

    # --- pass 1: colsum(x) + Gram(x); BN batch stats derived analytically ---
    colsum, gram = input_stats(x_rows, rows_per_step=rows_per_step, ncore=ncore)
    colsum_c = colsum.sum(axis=(0, 1))             # (Cin,)
    gram_c = gram.sum(axis=0)                      # (Cin, Cin)
    w_taps = w_mat.reshape(Cin, kHW, Cout)         # [ci, tap, co]
    count = jnp.float32(M * kHW)                   # true elements per channel
    ch_sum = jnp.einsum("i,itc->c", colsum_c, w_taps)
    ch_sq = jnp.einsum("itc,ij,jtc->c", w_taps, gram_c, w_taps)
    mean = ch_sum / count
    # NOTE: E[y^2]-E[y]^2 form; fine for zero-ish-mean activations (see review).
    var = jnp.maximum(ch_sq / count - mean * mean, 0.0)       # biased (train BN)
    scale_c = gamma.astype(jnp.float32) / jnp.sqrt(var + BN_EPS)
    shift_c = beta.astype(jnp.float32) - mean * scale_c
    scale_row = jnp.tile(scale_c, (P * kHW,)).reshape(1, NW)
    shift_row = jnp.tile(shift_c, (P * kHW,)).reshape(1, NW)

    # --- pass 2: fused deconv + normalize + affine + LeakyReLU ---
    out = deconv_bn_act(xg, w_bd, scale_row, shift_row, tm=tm)   # (Mp_pad, NW)

    # --- glue: unpack + single interleave/transpose back to NCHW ---
    # TODO(synk): fold this transpose into the write kernel (direct NCHW
    # stores) to remove one read+write of the largest tensor; needs an
    # in-kernel sublane/lane interleave and is only lane-dense for 2W >= 128.
    out = out.reshape(Mp_pad * P, kHW * Cout)[:M]               # drop padding
    out = out.reshape(N, H, W, 2, 2, Cout)
    out = jnp.transpose(out, (0, 5, 1, 3, 2, 4)).reshape(N, Cout, 2 * H, 2 * W)
    return out


# ----------------------------------------------------------------------------
# Pure-JAX reference (independent scatter-style transposed conv) for checking
# ----------------------------------------------------------------------------
def reference_forward(x_nchw, weight, bias, gamma, beta):
    N, Cin, H, W = x_nchw.shape
    Cout = weight.shape[1]
    out = jnp.zeros((N, Cout, 2 * H, 2 * W), jnp.float32)
    for ki in range(2):
        for kj in range(2):
            contrib = jnp.einsum("nchw,cd->ndhw", x_nchw, weight[:, :, ki, kj])
            out = out.at[:, :, ki::2, kj::2].add(contrib)
    out = out + bias[None, :, None, None]
    mean = out.mean(axis=(0, 2, 3))
    var = out.var(axis=(0, 2, 3))
    out = (out - mean[None, :, None, None]) / jnp.sqrt(
        var[None, :, None, None] + BN_EPS)
    out = out * gamma[None, :, None, None] + beta[None, :, None, None]
    return jnp.where(out >= 0, out, NEG_SLOPE * out)


if __name__ == "__main__":
    def run_check(N, Cin, H, W, Cout, key):
        k_x, k_w, k_b, k_g, k_be = jax.random.split(key, 5)
        x = jax.random.normal(k_x, (N, Cin, H, W), dtype=jnp.float32)
        # ConvTranspose2d weight layout: (in_channels, out_channels, kH, kW)
        weight = jax.random.normal(k_w, (Cin, Cout, 2, 2), dtype=jnp.float32) * 0.1
        bias = jax.random.normal(k_b, (Cout,), dtype=jnp.float32) * 0.1
        gamma = 1.0 + 0.1 * jax.random.normal(k_g, (Cout,), dtype=jnp.float32)
        beta = 0.1 * jax.random.normal(k_be, (Cout,), dtype=jnp.float32)

        out = jax.block_until_ready(
            deconvolution_layer_forward(x, weight, bias, gamma, beta))
        ref = jax.block_until_ready(
            reference_forward(x, weight, bias, gamma, beta))
        assert out.shape == (N, Cout, 2 * H, 2 * W), out.shape
        assert jnp.allclose(out, ref, rtol=1e-4, atol=1e-4), \
            float(jnp.max(jnp.abs(out - ref)))

    key = jax.random.PRNGKey(0)
    k1, k2 = jax.random.split(key)
    run_check(2, 4, 16, 16, 8, k1)   # main shape
    run_check(1, 3, 9, 9, 6, k2)     # odd shape: exercises packing + padding
    print("KERNEL_OK")
</pallas_src>

<mosaic_0001>
module attributes {stable_mosaic.version = 11 : i64} {
  func.func @_stats_kernel(%arg0: i32, %arg1: i32, %arg2: memref<512x4xf32, #tpu.memory_space<vmem>>, %arg3: memref<1x1x4xf32, #tpu.memory_space<vmem>>, %arg4: memref<1x4x4xf32, #tpu.memory_space<vmem>>) attributes {dimension_semantics = [#tpu.dimension_semantics<parallel>, #tpu.dimension_semantics<arbitrary>], iteration_bounds = array<i64: 1, 1>, scalar_prefetch = 0 : i64, scratch_operands = 0 : i64, tpu.core_type = #tpu.core_type<tc>, window_params = [{transform_indices = @transform_0, window_bounds = array<i64: 512, 4>}, {transform_indices = @transform_1, window_bounds = array<i64: 1, 1, 4>}, {transform_indices = @transform_2, window_bounds = array<i64: 1, 4, 4>}]} {
    %c0_i32 = arith.constant 0 : i32
    %0 = arith.cmpi eq, %arg1, %c0_i32 : i32
    %1 = arith.extui %0 : i1 to i32
    %c0_i32_0 = arith.constant 0 : i32
    %2 = arith.cmpi ne, %1, %c0_i32_0 : i32
    scf.if %2 {
      %cst_15 = arith.constant 0.000000e+00 : f32
      %15 = vector.broadcast %cst_15 : f32 to vector<1x1x4xf32>
      %c0_16 = arith.constant 0 : index
      %c0_17 = arith.constant 0 : index
      %c0_18 = arith.constant 0 : index
      %16 = vector.load %arg3[%c0_16, %c0_17, %c0_18] : memref<1x1x4xf32, #tpu.memory_space<vmem>>, vector<1x1x4xf32>
      tpu.vector_store %arg3[%c0_16, %c0_17, %c0_18], %15 {strides = array<i32>} : memref<1x1x4xf32, #tpu.memory_space<vmem>>, vector<1x1x4xf32>,
      %cst_19 = arith.constant 0.000000e+00 : f32
      %17 = vector.broadcast %cst_19 : f32 to vector<1x4x4xf32>
      %c0_20 = arith.constant 0 : index
      %c0_21 = arith.constant 0 : index
      %c0_22 = arith.constant 0 : index
      %18 = vector.load %arg4[%c0_20, %c0_21, %c0_22] : memref<1x4x4xf32, #tpu.memory_space<vmem>>, vector<1x4x4xf32>
      tpu.vector_store %arg4[%c0_20, %c0_21, %c0_22], %17 {strides = array<i32>} : memref<1x4x4xf32, #tpu.memory_space<vmem>>, vector<1x4x4xf32>,
    } else {
    }
    %c0 = arith.constant 0 : index
    %c0_1 = arith.constant 0 : index
    %3 = vector.load %arg2[%c0, %c0_1] : memref<512x4xf32, #tpu.memory_space<vmem>>, vector<512x4xf32>
    %c0_2 = arith.constant 0 : index
    %c0_3 = arith.constant 0 : index
    %c0_4 = arith.constant 0 : index
    %4 = vector.load %arg3[%c0_2, %c0_3, %c0_4] : memref<1x1x4xf32, #tpu.memory_space<vmem>>, vector<1x1x4xf32>
    %cst = arith.constant dense<0.000000e+00> : vector<4xf32>
    %5 = vector.multi_reduction <add>, %3, %cst [0] : vector<512x4xf32> to vector<4xf32>
    %6 = vector.shape_cast %5 : vector<4xf32> to vector<1x4xf32>
    %7 = vector.shape_cast %6 : vector<1x4xf32> to vector<1x1x4xf32>
    %8 = arith.addf %4, %7 : vector<1x1x4xf32>
    %c0_5 = arith.constant 0 : index
    %c0_6 = arith.constant 0 : index
    %c0_7 = arith.constant 0 : index
    %9 = vector.load %arg3[%c0_5, %c0_6, %c0_7] : memref<1x1x4xf32, #tpu.memory_space<vmem>>, vector<1x1x4xf32>
    tpu.vector_store %arg3[%c0_5, %c0_6, %c0_7], %8 {strides = array<i32>} : memref<1x1x4xf32, #tpu.memory_space<vmem>>, vector<1x1x4xf32>,
    %c0_8 = arith.constant 0 : index
    %c0_9 = arith.constant 0 : index
    %c0_10 = arith.constant 0 : index
    %10 = vector.load %arg4[%c0_8, %c0_9, %c0_10] : memref<1x4x4xf32, #tpu.memory_space<vmem>>, vector<1x4x4xf32>
    %cst_11 = arith.constant dense<0.000000e+00> : vector<4x4xf32>
    %11 = tpu.matmul %3, %3, %cst_11 {dimension_numbers = #tpu.dot_dimension_numbers<[0], [0], [1], [1], [0, 1, 1, 1], [], []>} : vector<512x4xf32>, vector<512x4xf32>, vector<4x4xf32> -> vector<4x4xf32>
    %12 = vector.shape_cast %11 : vector<4x4xf32> to vector<1x4x4xf32>
    %13 = arith.addf %10, %12 : vector<1x4x4xf32>
    %c0_12 = arith.constant 0 : index
    %c0_13 = arith.constant 0 : index
    %c0_14 = arith.constant 0 : index
    %14 = vector.load %arg4[%c0_12, %c0_13, %c0_14] : memref<1x4x4xf32, #tpu.memory_space<vmem>>, vector<1x4x4xf32>
    tpu.vector_store %arg4[%c0_12, %c0_13, %c0_14], %13 {strides = array<i32>} : memref<1x4x4xf32, #tpu.memory_space<vmem>>, vector<1x4x4xf32>,
    return
  }
  func.func @transform_0(%arg0: i32, %arg1: i32) -> (i32, i32) {
    %c1_i32 = arith.constant 1 : i32
    %0 = arith.muli %arg0, %c1_i32 : i32
    %1 = arith.addi %0, %arg1 : i32
    %c0_i32 = arith.constant 0 : i32
    %c0_i32_0 = arith.constant 0 : i32
    return %1, %c0_i32 : i32, i32
  }
  func.func @transform_1(%arg0: i32, %arg1: i32) -> (i32, i32, i32) {
    %c0_i32 = arith.constant 0 : i32
    %c0_i32_0 = arith.constant 0 : i32
    %c0_i32_1 = arith.constant 0 : i32
    return %arg0, %c0_i32, %c0_i32_0 : i32, i32, i32
  }
  func.func @transform_2(%arg0: i32, %arg1: i32) -> (i32, i32, i32) {
    %c0_i32 = arith.constant 0 : i32
    %c0_i32_0 = arith.constant 0 : i32
    %c0_i32_1 = arith.constant 0 : i32
    return %arg0, %c0_i32, %c0_i32_0 : i32, i32, i32
  }
}

</mosaic_0001>

<llo_original>
// kernel: tpu_custom_call.1
$region0: #{tpu_custom_call.1}
  #allocation0 [shape = 'u32[]', space=smem, size = 0x4, offset = 0x4, fixed_abs, tag = 'smem constant byte address 0x4 - core index']
  #allocation1 [shape = 'u32[72,128]{1,0:T(1,128)}', space=vmem, size = 0x9000, scoped, tag = 'internal scratch']
  %s0 = inlined_call_operand.vmem [shape: f32[512,4], index: 0, kind: input, shape index: {}]
  %s1 = inlined_call_operand.hbm [shape: f32[1,1,4], index: 1, kind: output, shape index: {0}]
  %s2 = inlined_call_operand.hbm [shape: f32[1,4,4], index: 2, kind: output, shape index: {1}]
  %3 = xla_tuple %s1, %s2
  %s4 = sld [smem:[#allocation0]]
  $region26: #{tpu_custom_call.1} parent=0
    _
  %s6 = ssub.s32 1, %s4
  %s7 = scalar_select 0, %s6, %s4
  $region1: #{tpu_custom_call.1} parent=0
    #allocation2 [shape = 'u8[512]{0}', space=vmem, size = 0x400, scoped, tag = 'output window, operand 0, single buffered']
    #allocation3 [shape = 's32[1]{0}', space=sflag, size = 0x4, scoped, tag = 'scoped memory for tpu_custom_call.1']
    #allocation4 [shape = 'u8[2048]{0}', space=vmem, size = 0x800, scoped, tag = 'output window, operand 1, single buffered']
    #allocation5 [shape = 's32[1]{0}', space=sflag, size = 0x4, scoped, tag = 'scoped memory for tpu_custom_call.1']
    %8 = vsyncpa [#allocation3], 0
    %9 = vsyncpa [#allocation5], 0
    // Predicated region
    $region2: #{tpu_custom_call.1} parent=1 // pred_check
      _
    $region3: #{tpu_custom_call.1} parent=1 // pred_check_branch
      %11 = sbr.rel (0) target = $region5
    $region4: #{tpu_custom_call.1} parent=1 // pred_region
      %s12 = sadd.s32 0, 0
      %s13 = smul.u32 64, %s12
      %p14 = scmp.lt.s32.totalorder %s13, 63
      %s15 = scalar_select %p14, %s13, 63
      %s16 = smul.addr %s15, 8
      %s17 = scalar_lea.vmem %s0, %s16
      %s18 = sadd.s32 0, 0
      %s19 = smul.u32 64, %s18
    $region5: #{tpu_custom_call.1} parent=1 // pred_fallthru
      _
    %s20 = sadd.s32 0, 0
    %s21 = smul.u32 64, %s20
    %p22 = scmp.lt.s32.totalorder %s21, 63
    %s23 = scalar_select %p22, %s21, 63
    %s24 = smul.addr %s23, 8
    %s25 = scalar_lea.vmem %s0, %s24
    %s26 = sadd.s32 0, 0
    %s27 = smul.u32 64, %s26
    %p28 = scmp.lt.s32.totalorder %s27, 63
    %s29 = scalar_select %p28, %s27, 63
    %s30 = smul.addr %s29, 8
    %s31 = scalar_lea.vmem %s0, %s30
    %s32 = sadd.s32 0, 0
    %s33 = smul.u32 64, %s32
    %p34 = scmp.eq.s32.totalorder 0, 0
    // Predicated region
    $region6: #{tpu_custom_call.1} parent=1 // pred_check
      %p35 = pneg %p34
    $region7: #{tpu_custom_call.1} parent=1 // pred_check_branch
      %37 = sbr.rel (%p35) target = $region9
    $region8: #{tpu_custom_call.1} parent=1 // pred_region
      %vm38 = vcmask 24576
      %39 = vst.msk [vmem:[#allocation2] sm:$0x1] %vm38, 0.0
      %vm40 = vcmask 27648
      %41 = vst.msk [vmem:[#allocation4] sm:$0xf] %vm40, 0.0
    $region9: #{tpu_custom_call.1} parent=1 // pred_fallthru
      _
    %v42 = vld [vmem:[%s31] sm:$0xff]
    %v43 = vld [vmem:[%s31 + $0x8] sm:$0xff]
    %v44 = vld [vmem:[%s31 + $0x10] sm:$0xff]
    %v45 = vld [vmem:[%s31 + $0x18] sm:$0xff]
    %v46 = vld [vmem:[%s31 + $0x20] sm:$0xff]
    %v47 = vld [vmem:[%s31 + $0x28] sm:$0xff]
    %v48 = vld [vmem:[%s31 + $0x30] sm:$0xff]
    %v49 = vld [vmem:[%s31 + $0x38] sm:$0xff]
    %v50 = vld [vmem:[%s31 + $0x40] sm:$0xff]
    %v51 = vld [vmem:[%s31 + $0x48] sm:$0xff]
    %v52 = vld [vmem:[%s31 + $0x50] sm:$0xff]
    %v53 = vld [vmem:[%s31 + $0x58] sm:$0xff]
    %v54 = vld [vmem:[%s31 + $0x60] sm:$0xff]
    %v55 = vld [vmem:[%s31 + $0x68] sm:$0xff]
    %v56 = vld [vmem:[%s31 + $0x70] sm:$0xff]
    %v57 = vld [vmem:[%s31 + $0x78] sm:$0xff]
    %v58 = vld [vmem:[%s31 + $0x80] sm:$0xff]
    %v59 = vld [vmem:[%s31 + $0x88] sm:$0xff]
    %v60 = vld [vmem:[%s31 + $0x90] sm:$0xff]
    %v61 = vld [vmem:[%s31 + $0x98] sm:$0xff]
    %v62 = vld [vmem:[%s31 + $0xa0] sm:$0xff]
    %v63 = vld [vmem:[%s31 + $0xa8] sm:$0xff]
    %v64 = vld [vmem:[%s31 + $0xb0] sm:$0xff]
    %v65 = vld [vmem:[%s31 + $0xb8] sm:$0xff]
    %v66 = vld [vmem:[%s31 + $0xc0] sm:$0xff]
    %v67 = vld [vmem:[%s31 + $0xc8] sm:$0xff]
    %v68 = vld [vmem:[%s31 + $0xd0] sm:$0xff]
    %v69 = vld [vmem:[%s31 + $0xd8] sm:$0xff]
    %v70 = vld [vmem:[%s31 + $0xe0] sm:$0xff]
    %v71 = vld [vmem:[%s31 + $0xe8] sm:$0xff]
    %v72 = vld [vmem:[%s31 + $0xf0] sm:$0xff]
    %v73 = vld [vmem:[%s31 + $0xf8] sm:$0xff]
    %v74 = vld [vmem:[%s31 + $0x100] sm:$0xff]
    %v75 = vld [vmem:[%s31 + $0x108] sm:$0xff]
    %v76 = vld [vmem:[%s31 + $0x110] sm:$0xff]
    %v77 = vld [vmem:[%s31 + $0x118] sm:$0xff]
    %v78 = vld [vmem:[%s31 + $0x120] sm:$0xff]
    %v79 = vld [vmem:[%s31 + $0x128] sm:$0xff]
    %v80 = vld [vmem:[%s31 + $0x130] sm:$0xff]
    %v81 = vld [vmem:[%s31 + $0x138] sm:$0xff]
    %v82 = vld [vmem:[%s31 + $0x140] sm:$0xff]
    %v83 = vld [vmem:[%s31 + $0x148] sm:$0xff]
    %v84 = vld [vmem:[%s31 + $0x150] sm:$0xff]
    %v85 = vld [vmem:[%s31 + $0x158] sm:$0xff]
    %v86 = vld [vmem:[%s31 + $0x160] sm:$0xff]
    %v87 = vld [vmem:[%s31 + $0x168] sm:$0xff]
    %v88 = vld [vmem:[%s31 + $0x170] sm:$0xff]
    %v89 = vld [vmem:[%s31 + $0x178] sm:$0xff]
    %v90 = vld [vmem:[%s31 + $0x180] sm:$0xff]
    %v91 = vld [vmem:[%s31 + $0x188] sm:$0xff]
    %v92 = vld [vmem:[%s31 + $0x190] sm:$0xff]
    %v93 = vld [vmem:[%s31 + $0x198] sm:$0xff]
    %v94 = vld [vmem:[%s31 + $0x1a0] sm:$0xff]
    %v95 = vld [vmem:[%s31 + $0x1a8] sm:$0xff]
    %v96 = vld [vmem:[%s31 + $0x1b0] sm:$0xff]
    %v97 = vld [vmem:[%s31 + $0x1b8] sm:$0xff]
    %v98 = vld [vmem:[%s31 + $0x1c0] sm:$0xff]
    %v99 = vld [vmem:[%s31 + $0x1c8] sm:$0xff]
    %v100 = vld [vmem:[%s31 + $0x1d0] sm:$0xff]
    %v101 = vld [vmem:[%s31 + $0x1d8] sm:$0xff]
    %v102 = vld [vmem:[%s31 + $0x1e0] sm:$0xff]
    %v103 = vld [vmem:[%s31 + $0x1e8] sm:$0xff]
    %v104 = vld [vmem:[%s31 + $0x1f0] sm:$0xff]
    %v105 = vld [vmem:[%s31 + $0x1f8] sm:$0xff]
    %v106 = vld [vmem:[#allocation2] sm:$0x1]
    %vm107 = vcmask 31744
    %v108 = vsel %vm107, %v42, 0.0
    %v109 = vsel %vm107, %v43, 0.0
    %v110 = vadd.f32 %v108, %v109
    %v111 = vsel %vm107, %v44, 0.0
    %v112 = vadd.f32 %v110, %v111
    %v113 = vsel %vm107, %v45, 0.0
    %v114 = vadd.f32 %v112, %v113
    %v115 = vsel %vm107, %v46, 0.0
    %v116 = vadd.f32 %v114, %v115
    %v117 = vsel %vm107, %v47, 0.0
    %v118 = vadd.f32 %v116, %v117
    %v119 = vsel %vm107, %v48, 0.0
    %v120 = vadd.f32 %v118, %v119
    %v121 = vsel %vm107, %v49, 0.0
    %v122 = vadd.f32 %v120, %v121
    %v123 = vsel %vm107, %v50, 0.0
    %v124 = vadd.f32 %v122, %v123
    %v125 = vsel %vm107, %v51, 0.0
    %v126 = vadd.f32 %v124, %v125
    %v127 = vsel %vm107, %v52, 0.0
    %v128 = vadd.f32 %v126, %v127
    %v129 = vsel %vm107, %v53, 0.0
    %v130 = vadd.f32 %v128, %v129
    %v131 = vsel %vm107, %v54, 0.0
    %v132 = vadd.f32 %v130, %v131
    %v133 = vsel %vm107, %v55, 0.0
    %v134 = vadd.f32 %v132, %v133
    %v135 = vsel %vm107, %v56, 0.0
    %v136 = vadd.f32 %v134, %v135
    %v137 = vsel %vm107, %v57, 0.0
    %v138 = vadd.f32 %v136, %v137
    %v139 = vsel %vm107, %v58, 0.0
    %v140 = vadd.f32 %v138, %v139
    %v141 = vsel %vm107, %v59, 0.0
    %v142 = vadd.f32 %v140, %v141
    %v143 = vsel %vm107, %v60, 0.0
    %v144 = vadd.f32 %v142, %v143
    %v145 = vsel %vm107, %v61, 0.0
    %v146 = vadd.f32 %v144, %v145
    %v147 = vsel %vm107, %v62, 0.0
    %v148 = vadd.f32 %v146, %v147
    %v149 = vsel %vm107, %v63, 0.0
    %v150 = vadd.f32 %v148, %v149
    %v151 = vsel %vm107, %v64, 0.0
    %v152 = vadd.f32 %v150, %v151
    %v153 = vsel %vm107, %v65, 0.0
    %v154 = vadd.f32 %v152, %v153
    %v155 = vsel %vm107, %v66, 0.0
    %v156 = vadd.f32 %v154, %v155
    %v157 = vsel %vm107, %v67, 0.0
    %v158 = vadd.f32 %v156, %v157
    %v159 = vsel %vm107, %v68, 0.0
    %v160 = vadd.f32 %v158, %v159
    %v161 = vsel %vm107, %v69, 0.0
    %v162 = vadd.f32 %v160, %v161
    %v163 = vsel %vm107, %v70, 0.0
    %v164 = vadd.f32 %v162, %v163
    %v165 = vsel %vm107, %v71, 0.0
    %v166 = vadd.f32 %v164, %v165
    %v167 = vsel %vm107, %v72, 0.0
    %v168 = vadd.f32 %v166, %v167
    %v169 = vsel %vm107, %v73, 0.0
    %v170 = vadd.f32 %v168, %v169
    %v171 = vsel %vm107, %v74, 0.0
    %v172 = vadd.f32 %v170, %v171
    %v173 = vsel %vm107, %v75, 0.0
    %v174 = vadd.f32 %v172, %v173
    %v175 = vsel %vm107, %v76, 0.0
    %v176 = vadd.f32 %v174, %v175
    %v177 = vsel %vm107, %v77, 0.0
    %v178 = vadd.f32 %v176, %v177
    %v179 = vsel %vm107, %v78, 0.0
    %v180 = vadd.f32 %v178, %v179
    %v181 = vsel %vm107, %v79, 0.0
    %v182 = vadd.f32 %v180, %v181
    %v183 = vsel %vm107, %v80, 0.0
    %v184 = vadd.f32 %v182, %v183
    %v185 = vsel %vm107, %v81, 0.0
    %v186 = vadd.f32 %v184, %v185
    %v187 = vsel %vm107, %v82, 0.0
    %v188 = vadd.f32 %v186, %v187
    %v189 = vsel %vm107, %v83, 0.0
    %v190 = vadd.f32 %v188, %v189
    %v191 = vsel %vm107, %v84, 0.0
    %v192 = vadd.f32 %v190, %v191
    %v193 = vsel %vm107, %v85, 0.0
    %v194 = vadd.f32 %v192, %v193
    %v195 = vsel %vm107, %v86, 0.0
    %v196 = vadd.f32 %v194, %v195
    %v197 = vsel %vm107, %v87, 0.0
    %v198 = vadd.f32 %v196, %v197
    %v199 = vsel %vm107, %v88, 0.0
    %v200 = vadd.f32 %v198, %v199
    %v201 = vsel %vm107, %v89, 0.0
    %v202 = vadd.f32 %v200, %v201
    %v203 = vsel %vm107, %v90, 0.0
    %v204 = vadd.f32 %v202, %v203
    %v205 = vsel %vm107, %v91, 0.0
    %v206 = vadd.f32 %v204, %v205
    %v207 = vsel %vm107, %v92, 0.0
    %v208 = vadd.f32 %v206, %v207
    %v209 = vsel %vm107, %v93, 0.0
    %v210 = vadd.f32 %v208, %v209
    %v211 = vsel %vm107, %v94, 0.0
    %v212 = vadd.f32 %v210, %v211
    %v213 = vsel %vm107, %v95, 0.0
    %v214 = vadd.f32 %v212, %v213
    %v215 = vsel %vm107, %v96, 0.0
    %v216 = vadd.f32 %v214, %v215
    %v217 = vsel %vm107, %v97, 0.0
    %v218 = vadd.f32 %v216, %v217
    %v219 = vsel %vm107, %v98, 0.0
    %v220 = vadd.f32 %v218, %v219
    %v221 = vsel %vm107, %v99, 0.0
    %v222 = vadd.f32 %v220, %v221
    %v223 = vsel %vm107, %v100, 0.0
    %v224 = vadd.f32 %v222, %v223
    %v225 = vsel %vm107, %v101, 0.0
    %v226 = vadd.f32 %v224, %v225
    %v227 = vsel %vm107, %v102, 0.0
    %v228 = vadd.f32 %v226, %v227
    %v229 = vsel %vm107, %v103, 0.0
    %v230 = vadd.f32 %v228, %v229
    %v231 = vsel %vm107, %v104, 0.0
    %v232 = vadd.f32 %v230, %v231
    %v233 = vsel %vm107, %v105, 0.0
    %v234 = vadd.f32 %v232, %v233
    %v235 = vrot.slane %v234, 4
    %v236 = vadd.f32 %v234, %v235
    %v237 = vrot.slane %v236, 2
    %v238 = vadd.f32 %v236, %v237
    %v239 = vrot.slane %v238, 1
    %v240 = vadd.f32 %v238, %v239
    %v241 = vadd.f32 %v106, %v240
    %vm242 = vcmask 24576
    %243 = vst.msk [vmem:[#allocation2] sm:$0x1] %vm242, %v241
    %v244 = vld [vmem:[#allocation4] sm:$0xf]
    %245 = vxpose.xlu0.b32.start [1/16] %v42, 128
    %246 = vxpose.xlu0.b32.cont [2/16] %v43, 128
    %247 = vxpose.xlu0.b32.cont [3/16] %v44, 128
    %248 = vxpose.xlu0.b32.cont [4/16] %v45, 128
    %249 = vxpose.xlu0.b32.cont [5/16] %v46, 128
    %250 = vxpose.xlu0.b32.cont [6/16] %v47, 128
    %251 = vxpose.xlu0.b32.cont [7/16] %v48, 128
    %252 = vxpose.xlu0.b32.cont [8/16] %v49, 128
    %253 = vxpose.xlu0.b32.cont [9/16] %v50, 128
    %254 = vxpose.xlu0.b32.cont [10/16] %v51, 128
    %255 = vxpose.xlu0.b32.cont [11/16] %v52, 128
    %256 = vxpose.xlu0.b32.cont [12/16] %v53, 128
    %257 = vxpose.xlu0.b32.cont [13/16] %v54, 128
    %258 = vxpose.xlu0.b32.cont [14/16] %v55, 128
    %259 = vxpose.xlu0.b32.cont [15/16] %v56, 128
    %260 = vxpose.xlu0.b32.end [16/16] %v57, 128
    %v261 = vpop.trf.xlu0
    %v262 = vpop.trf.xlu0
    %v263 = vpop.trf.xlu0
    %v264 = vpop.trf.xlu0
    %v265 = vpop.trf.xlu0
    %v266 = vpop.trf.xlu0
    %v267 = vpop.trf.xlu0
    %v268 = vpop.trf.xlu0
    %v269 = vpop.trf.xlu0
    %v270 = vpop.trf.xlu0
    %v271 = vpop.trf.xlu0
    %v272 = vpop.trf.xlu0
    %v273 = vpop.trf.xlu0
    %v274 = vpop.trf.xlu0
    %v275 = vpop.trf.xlu0
    %v276 = vpop.trf.xlu0
    %277 = vxpose.xlu0.b32.start [1/16] %v58, 128
    %278 = vxpose.xlu0.b32.cont [2/16] %v59, 128
    %279 = vxpose.xlu0.b32.cont [3/16] %v60, 128
    %280 = vxpose.xlu0.b32.cont [4/16] %v61, 128
    %281 = vxpose.xlu0.b32.cont [5/16] %v62, 128
    %282 = vxpose.xlu0.b32.cont [6/16] %v63, 128
    %283 = vxpose.xlu0.b32.cont [7/16] %v64, 128
    %284 = vxpose.xlu0.b32.cont [8/16] %v65, 128
    %285 = vxpose.xlu0.b32.cont [9/16] %v66, 128
    %286 = vxpose.xlu0.b32.cont [10/16] %v67, 128
    %287 = vxpose.xlu0.b32.cont [11/16] %v68, 128
    %288 = vxpose.xlu0.b32.cont [12/16] %v69, 128
    %289 = vxpose.xlu0.b32.cont [13/16] %v70, 128
    %290 = vxpose.xlu0.b32.cont [14/16] %v71, 128
    %291 = vxpose.xlu0.b32.cont [15/16] %v72, 128
    %292 = vxpose.xlu0.b32.end [16/16] %v73, 128
    %v293 = vpop.trf.xlu0
    %v294 = vpop.trf.xlu0
    %v295 = vpop.trf.xlu0
    %v296 = vpop.trf.xlu0
    %v297 = vpop.trf.xlu0
    %v298 = vpop.trf.xlu0
    %v299 = vpop.trf.xlu0
    %v300 = vpop.trf.xlu0
    %v301 = vpop.trf.xlu0
    %v302 = vpop.trf.xlu0
    %v303 = vpop.trf.xlu0
    %v304 = vpop.trf.xlu0
    %v305 = vpop.trf.xlu0
    %v306 = vpop.trf.xlu0
    %v307 = vpop.trf.xlu0
    %v308 = vpop.trf.xlu0
    %309 = vxpose.xlu0.b32.start [1/16] %v74, 128
    %310 = vxpose.xlu0.b32.cont [2/16] %v75, 128
    %311 = vxpose.xlu0.b32.cont [3/16] %v76, 128
    %312 = vxpose.xlu0.b32.cont [4/16] %v77, 128
    %313 = vxpose.xlu0.b32.cont [5/16] %v78, 128
    %314 = vxpose.xlu0.b32.cont [6/16] %v79, 128
    %315 = vxpose.xlu0.b32.cont [7/16] %v80, 128
    %316 = vxpose.xlu0.b32.cont [8/16] %v81, 128
    %317 = vxpose.xlu0.b32.cont [9/16] %v82, 128
    %318 = vxpose.xlu0.b32.cont [10/16] %v83, 128
    %319 = vxpose.xlu0.b32.cont [11/16] %v84, 128
    %320 = vxpose.xlu0.b32.cont [12/16] %v85, 128
    %321 = vxpose.xlu0.b32.cont [13/16] %v86, 128
    %322 = vxpose.xlu0.b32.cont [14/16] %v87, 128
    %323 = vxpose.xlu0.b32.cont [15/16] %v88, 128
    %324 = vxpose.xlu0.b32.end [16/16] %v89, 128
    %v325 = vpop.trf.xlu0
    %v326 = vpop.trf.xlu0
    %v327 = vpop.trf.xlu0
    %v328 = vpop.trf.xlu0
    %v329 = vpop.trf.xlu0
    %v330 = vpop.trf.xlu0
    %v331 = vpop.trf.xlu0
    %v332 = vpop.trf.xlu0
    %v333 = vpop.trf.xlu0
    %v334 = vpop.trf.xlu0
    %v335 = vpop.trf.xlu0
    %v336 = vpop.trf.xlu0
    %v337 = vpop.trf.xlu0
    %v338 = vpop.trf.xlu0
    %v339 = vpop.trf.xlu0
    %v340 = vpop.trf.xlu0
    %341 = vxpose.xlu0.b32.start [1/16] %v90, 128
    %342 = vxpose.xlu0.b32.cont [2/16] %v91, 128
    %343 = vxpose.xlu0.b32.cont [3/16] %v92, 128
    %344 = vxpose.xlu0.b32.cont [4/16] %v93, 128
    %345 = vxpose.xlu0.b32.cont [5/16] %v94, 128
    %346 = vxpose.xlu0.b32.cont [6/16] %v95, 128
    %347 = vxpose.xlu0.b32.cont [7/16] %v96, 128
    %348 = vxpose.xlu0.b32.cont [8/16] %v97, 128
    %349 = vxpose.xlu0.b32.cont [9/16] %v98, 128
    %350 = vxpose.xlu0.b32.cont [10/16] %v99, 128
    %351 = vxpose.xlu0.b32.cont [11/16] %v100, 128
    %352 = vxpose.xlu0.b32.cont [12/16] %v101, 128
    %353 = vxpose.xlu0.b32.cont [13/16] %v102, 128
    %354 = vxpose.xlu0.b32.cont [14/16] %v103, 128
    %355 = vxpose.xlu0.b32.cont [15/16] %v104, 128
    %356 = vxpose.xlu0.b32.end [16/16] %v105, 128
    %v357 = vpop.trf.xlu0
    %v358 = vpop.trf.xlu0
    %v359 = vpop.trf.xlu0
    %v360 = vpop.trf.xlu0
    %v361 = vpop.trf.xlu0
    %v362 = vpop.trf.xlu0
    %v363 = vpop.trf.xlu0
    %v364 = vpop.trf.xlu0
    %v365 = vpop.trf.xlu0
    %v366 = vpop.trf.xlu0
    %v367 = vpop.trf.xlu0
    %v368 = vpop.trf.xlu0
    %v369 = vpop.trf.xlu0
    %v370 = vpop.trf.xlu0
    %v371 = vpop.trf.xlu0
    %v372 = vpop.trf.xlu0
    %373 = vmatpush.msra.mxu0 %v57
    %374 = vmatpush.msra.mxu0 %v56
    %375 = vmatpush.msra.mxu0 %v55
    %376 = vmatpush.msra.mxu0 %v54
    %377 = vmatpush.msra.mxu0 %v53
    %378 = vmatpush.msra.mxu0 %v52
    %379 = vmatpush.msra.mxu0 %v51
    %380 = vmatpush.msra.mxu0 %v50
    %381 = vmatpush.msra.mxu0 %v49
    %382 = vmatpush.msra.mxu0 %v48
    %383 = vmatpush.msra.mxu0 %v47
    %384 = vmatpush.msra.mxu0 %v46
    %385 = vmatpush.msra.mxu0 %v45
    %386 = vmatpush.msra.mxu0 %v44
    %387 = vmatpush.msra.mxu0 %v43
    %388 = vmatpush.msra.mxu0 %v42
    %389 = vmatmul.f32.gmra.mxu0 %v261
    %v390 = vpop.f32.mrf.mxu0
    %v391 = vadd.f32 0.0, %v390
    %392 = vdwg.mxu0
    %393 = vmatpush.msra.mxu0 %v73
    %394 = vmatpush.msra.mxu0 %v72
    %395 = vmatpush.msra.mxu0 %v71
    %396 = vmatpush.msra.mxu0 %v70
    %397 = vmatpush.msra.mxu0 %v69
    %398 = vmatpush.msra.mxu0 %v68
    %399 = vmatpush.msra.mxu0 %v67
    %400 = vmatpush.msra.mxu0 %v66
    %401 = vmatpush.msra.mxu0 %v65
    %402 = vmatpush.msra.mxu0 %v64
    %403 = vmatpush.msra.mxu0 %v63
    %404 = vmatpush.msra.mxu0 %v62
    %405 = vmatpush.msra.mxu0 %v61
    %406 = vmatpush.msra.mxu0 %v60
    %407 = vmatpush.msra.mxu0 %v59
    %408 = vmatpush.msra.mxu0 %v58
    %409 = vmatmul.f32.gmra.mxu0 %v293
    %v410 = vpop.f32.mrf.mxu0
    %v411 = vadd.f32 %v391, %v410
    %412 = vdwg.mxu0
    %413 = vmatpush.msra.mxu0 %v89
    %414 = vmatpush.msra.mxu0 %v88
    %415 = vmatpush.msra.mxu0 %v87
    %416 = vmatpush.msra.mxu0 %v86
    %417 = vmatpush.msra.mxu0 %v85
    %418 = vmatpush.msra.mxu0 %v84
    %419 = vmatpush.msra.mxu0 %v83
    %420 = vmatpush.msra.mxu0 %v82
    %421 = vmatpush.msra.mxu0 %v81
    %422 = vmatpush.msra.mxu0 %v80
    %423 = vmatpush.msra.mxu0 %v79
    %424 = vmatpush.msra.mxu0 %v78
    %425 = vmatpush.msra.mxu0 %v77
    %426 = vmatpush.msra.mxu0 %v76
    %427 = vmatpush.msra.mxu0 %v75
    %428 = vmatpush.msra.mxu0 %v74
    %429 = vmatmul.f32.gmra.mxu0 %v325
    %v430 = vpop.f32.mrf.mxu0
    %v431 = vadd.f32 %v411, %v430
    %432 = vdwg.mxu0
    %433 = vmatpush.msra.mxu0 %v105
    %434 = vmatpush.msra.mxu0 %v104
    %435 = vmatpush.msra.mxu0 %v103
    %436 = vmatpush.msra.mxu0 %v102
    %437 = vmatpush.msra.mxu0 %v101
    %438 = vmatpush.msra.mxu0 %v100
    %439 = vmatpush.msra.mxu0 %v99
    %440 = vmatpush.msra.mxu0 %v98
    %441 = vmatpush.msra.mxu0 %v97
    %442 = vmatpush.msra.mxu0 %v96
    %443 = vmatpush.msra.mxu0 %v95
    %444 = vmatpush.msra.mxu0 %v94
    %445 = vmatpush.msra.mxu0 %v93
    %446 = vmatpush.msra.mxu0 %v92
    %447 = vmatpush.msra.mxu0 %v91
    %448 = vmatpush.msra.mxu0 %v90
    %449 = vmatmul.f32.gmra.mxu0 %v357
    %v450 = vpop.f32.mrf.mxu0
    %v451 = vadd.f32 %v431, %v450
    %452 = vdwg.mxu0
    %v453 = vadd.f32 %v244, %v451
    %vm454 = vcmask 27648
    %455 = vst.msk [vmem:[#allocation4] sm:$0xf] %vm454, %v453
    // Predicated region
    $region10: #{tpu_custom_call.1} parent=1 // pred_check
      _
    $region11: #{tpu_custom_call.1} parent=1 // pred_check_branch
      %457 = sbr.rel (0) target = $region13
    $region12: #{tpu_custom_call.1} parent=1 // pred_region
      %459 = vsyncadd [#allocation3], 0
      %s461 = sshll.u32 [#allocation2], 4
      %s462 = int_to_ptr.vmem [resolvable:$true] %s461
      %s463 = sshll.u32 %s1, 4
      %s464 = int_to_ptr.hbm [resolvable:$true] %s463
      %466 = dma.vmem_to_hbm [thread:$0]  %s462, 16, %s464, [#allocation3]
    $region13: #{tpu_custom_call.1} parent=1 // pred_fallthru
      _
    // Predicated region
    $region14: #{tpu_custom_call.1} parent=1 // pred_check
      _
    $region15: #{tpu_custom_call.1} parent=1 // pred_check_branch
      %468 = sbr.rel (0) target = $region17
    $region16: #{tpu_custom_call.1} parent=1 // pred_region
      %470 = vsyncadd [#allocation5], 0
      %s472 = sshll.u32 [#allocation4], 4
      %s473 = int_to_ptr.vmem [resolvable:$true] %s472
      %s474 = sshll.u32 %s2, 4
      %s475 = int_to_ptr.hbm [resolvable:$true] %s474
      %477 = dma.vmem_to_hbm [thread:$0]  %s473, 64, %s475, [#allocation5]
    $region17: #{tpu_custom_call.1} parent=1 // pred_fallthru
      _
    // Predicated region
    $region18: #{tpu_custom_call.1} parent=1 // pred_check
      _
    $region19: #{tpu_custom_call.1} parent=1 // pred_check_branch
      %479 = sbr.rel (0) target = $region21
    $region20: #{tpu_custom_call.1} parent=1 // pred_region
      %481 = dma.done [#allocation3], 16
    $region21: #{tpu_custom_call.1} parent=1 // pred_fallthru
      _
    // Predicated region
    $region22: #{tpu_custom_call.1} parent=1 // pred_check
      _
    $region23: #{tpu_custom_call.1} parent=1 // pred_check_branch
      %483 = sbr.rel (0) target = $region25
    $region24: #{tpu_custom_call.1} parent=1 // pred_region
      %485 = dma.done [#allocation5], 64
    $region25: #{tpu_custom_call.1} parent=1 // pred_fallthru
      _
    %486 = vsyncpa [#allocation3], 1
    %487 = vsyncpa [#allocation5], 1

</llo_original>
